<compile_context>
chip_gen: v7x
topology: tpu7x:2x2x1
jax: 0.10.0
libtpu: 0.0.40
codegen_flags: <defaults>
</compile_context>

<pallas_src>
import jax
import jax.numpy as jnp
from jax import lax
from jax.experimental import pallas as pl
from jax.experimental.pallas import tpu as pltpu


def smlayer_kernel(x_ref, v_ref, u_ref, b_ref, o_ref, xv_ref):
    """One (batch-tile i, output-tile j) grid step.

    NOTE: the xv-scratch reuse below is only correct because the output-tile
    axis (grid axis 1) is the innermost, sequential ("arbitrary") grid axis,
    so every batch tile starts at j == 0 (also under megacore sharding of the
    "parallel" batch axis).  Do not reorder the grid axes or mark axis 1
    "parallel" without removing this optimization.
    """
    @pl.when(pl.program_id(1) == 0)
    def _():
        # Low-rank projection xv = x @ V.T, computed once per batch tile and
        # kept resident in VMEM scratch across all output tiles.  The cast to
        # the MXU feed dtype (bf16 when weights are bf16) happens once here.
        xv = lax.dot_general(
            x_ref[...], v_ref[...],
            dimension_numbers=(((1,), (1,)), ((), ())),
            preferred_element_type=jnp.float32,
        )
        xv_ref[...] = xv.astype(xv_ref.dtype)

    # y_tile = xv @ U_tile.T  (contract the rank axis; no ref transpose).
    y = lax.dot_general(
        xv_ref[...], u_ref[...],
        dimension_numbers=(((1,), (1,)), ((), ())),
        preferred_element_type=jnp.float32,
    )
    o_ref[...] = (y + b_ref[...].astype(jnp.float32)).astype(o_ref.dtype)


def _round_up(a, m):
    return (a + m - 1) // m * m


def _pick_tile(dim, candidates, min_blocks=1):
    for c in candidates:
        if dim % c == 0 and dim // c >= min_blocks:
            return c
    return dim  # single full-extent block fallback


def _device_generation():
    try:
        kind = jax.devices()[0].device_kind.lower()
    except Exception:
        return "unknown"
    if "v7" in kind or "7x" in kind:
        return "v7x"
    if "v6" in kind:
        return "v6e"
    if "v5" in kind:
        return "v5e"
    return "unknown"


class SMLayerPallas:
    """y = x @ (U @ V).T + bias, computed as (x @ V.T) @ U.T + bias.

    Weights/bias are padded to TPU-friendly shapes ONCE here (they are static
    parameters); the per-call path only pads the activation when it is not
    already (8, 128)-aligned.
    """

    def __init__(self, U, V, bias=None):
        out_f, rank = U.shape
        rank_v, in_f = V.shape
        assert rank_v == rank, (V.shape, U.shape)
        self.in_features = in_f
        self.out_features = out_f
        self.rank = rank

        # Lane dims -> multiples of 128; rank only to 8 (sublane dim of V).
        # Zero padding is exact: padded rank rows contribute 0 to both
        # matmuls, padded in/out rows/cols are multiplied by zeros or sliced
        # off below.
        self.in_p = _round_up(in_f, 128)
        self.out_p = _round_up(out_f, 128)
        self.rank_p = _round_up(rank, 8)

        if bias is None:
            bias = jnp.zeros((out_f,), dtype=U.dtype)

        self.U_p = jnp.pad(U, ((0, self.out_p - out_f), (0, self.rank_p - rank)))
        self.V_p = jnp.pad(V, ((0, self.rank_p - rank), (0, self.in_p - in_f)))
        self.b_p = jnp.pad(bias.reshape(1, out_f),
                           ((0, 0), (0, self.out_p - out_f)))

        self.w_dtype = U.dtype
        # xv scratch lives in the MXU feed dtype of the second matmul.
        self.xv_dtype = jnp.bfloat16 if U.dtype == jnp.bfloat16 else jnp.float32

        self.generation = _device_generation()

    def _select_tiles(self, B_p, x_dtype):
        gen = self.generation
        if gen in ("v7x", "unknown"):
            # v7x: 64 MiB physical VMEM per TC -> tight budget, modest tiles,
            # and >= 2 batch tiles so megacore sharding uses both TCs.
            vmem_cap = 48 * 1024 * 1024
            tm_cands = (256, 128, 64, 32, 16, 8)
            tn_cands = (512, 256, 128)
            min_batch_blocks = 2
        else:
            # v5e / v6e: 128 MiB VMEM, single TC -> fewer / larger blocks to
            # amortize the ~0.35us per-grid-step overhead (layer is HBM-bound).
            vmem_cap = 96 * 1024 * 1024
            tm_cands = (512, 256, 128, 64, 32, 16, 8)
            tn_cands = (1024, 512, 256, 128)
            min_batch_blocks = 1

        tm = _pick_tile(B_p, tm_cands, min_blocks=min_batch_blocks)
        tn = _pick_tile(self.out_p, tn_cands)

        x_bytes = jnp.dtype(x_dtype).itemsize
        w_bytes = jnp.dtype(self.w_dtype).itemsize
        xv_bytes = jnp.dtype(self.xv_dtype).itemsize

        def est(tm_, tn_):
            return (2 * tm_ * self.in_p * x_bytes            # x block (dbl-buffered)
                    + 2 * tn_ * self.rank_p * w_bytes        # U tile
                    + 2 * tn_ * w_bytes                      # bias tile
                    + 2 * tm_ * tn_ * x_bytes                # output tile
                    + 2 * self.rank_p * self.in_p * w_bytes  # V (conservative 2x)
                    + tm_ * self.rank_p * xv_bytes)          # xv scratch

        budget = int(0.75 * vmem_cap)
        while est(tm, tn) > budget:
            if tm > 8 and B_p % (tm // 2) == 0:
                tm //= 2
            elif tn > 128 and self.out_p % (tn // 2) == 0:
                tn //= 2
            else:
                break
        # TODO(synk): for very wide in_features the double-buffered (tm, in_p)
        # x block becomes the dominant VMEM sink; an inner K grid axis that
        # accumulates into xv_ref would relieve it.  Not needed at these sizes.

        vmem_limit = int(min(vmem_cap, max(32 * 1024 * 1024, 2 * est(tm, tn))))
        return tm, tn, vmem_limit

    def __call__(self, x):
        B, in_f = x.shape
        assert in_f == self.in_features
        B_p = _round_up(B, 8)

        # Skip the activation pad (an extra HBM round trip) when x is already
        # sublane/lane aligned.
        if B_p != B or self.in_p != in_f:
            x_p = jnp.pad(x, ((0, B_p - B), (0, self.in_p - in_f)))
        else:
            x_p = x

        tm, tn, vmem_limit = self._select_tiles(B_p, x.dtype)
        grid = (B_p // tm, self.out_p // tn)

        y_p = pl.pallas_call(
            smlayer_kernel,
            out_shape=jax.ShapeDtypeStruct((B_p, self.out_p), x.dtype),
            grid_spec=pltpu.PrefetchScalarGridSpec(
                num_scalar_prefetch=0,
                grid=grid,
                in_specs=[
                    pl.BlockSpec((tm, self.in_p), lambda i, j: (i, 0)),           # x
                    pl.BlockSpec((self.rank_p, self.in_p), lambda i, j: (0, 0)),  # V (tiny, resident)
                    pl.BlockSpec((tn, self.rank_p), lambda i, j: (j, 0)),         # U tile
                    pl.BlockSpec((1, tn), lambda i, j: (0, j)),                   # bias tile
                ],
                out_specs=pl.BlockSpec((tm, tn), lambda i, j: (i, j)),
                scratch_shapes=[pltpu.VMEM((tm, self.rank_p), self.xv_dtype)],
            ),
            compiler_params=pltpu.CompilerParams(
                # Batch axis is megacore-parallel; the output axis MUST stay
                # sequential ("arbitrary") — see smlayer_kernel docstring.
                dimension_semantics=("parallel", "arbitrary"),
                vmem_limit_bytes=vmem_limit,
            ),
        )(x_p, self.V_p, self.U_p, self.b_p)

        return y_p[:B, :self.out_features]


def smlayer_forward(x, U, V, bias=None):
    """Convenience one-shot wrapper (pads weights per call; prefer the class)."""
    return SMLayerPallas(U, V, bias)(x)


if __name__ == "__main__":
    # Small, deterministic sizes that still exercise the 2-D grid (multiple
    # batch tiles x 3 output tiles) and the xv-scratch reuse across j.
    B = 256
    in_features = 256
    out_features = 384
    rank = 16

    key = jax.random.PRNGKey(0)
    kx, ku, kv, kb = jax.random.split(key, 4)

    x = jax.random.normal(kx, (B, in_features), dtype=jnp.float32)
    U = jax.random.normal(ku, (out_features, rank), dtype=jnp.float32) * 0.1
    V = jax.random.normal(kv, (rank, in_features), dtype=jnp.float32) * 0.1
    bias = jax.random.normal(kb, (out_features,), dtype=jnp.float32) * 0.01

    layer = SMLayerPallas(U, V, bias)   # weights padded once, here
    y = layer(x)
    jax.block_until_ready(y)

    # Pure-JAX reference check.
    W = U @ V
    y_ref = x @ W.T + bias[None, :]
    assert y.shape == (B, out_features)
    assert jnp.allclose(y, y_ref, atol=5e-3, rtol=5e-3), (
        float(jnp.max(jnp.abs(y - y_ref))))

    print("KERNEL_OK")
</pallas_src>

<mosaic_0001>
module attributes {stable_mosaic.version = 11 : i64} {
  func.func @smlayer_kernel(%arg0: i32, %arg1: i32, %arg2: memref<128x256xf32, #tpu.memory_space<vmem>>, %arg3: memref<16x256xf32, #tpu.memory_space<vmem>>, %arg4: memref<128x16xf32, #tpu.memory_space<vmem>>, %arg5: memref<1x128xf32, #tpu.memory_space<vmem>>, %arg6: memref<128x128xf32, #tpu.memory_space<vmem>>, %arg7: memref<128x16xf32, #tpu.memory_space<vmem>>) attributes {dimension_semantics = [#tpu.dimension_semantics<parallel>, #tpu.dimension_semantics<arbitrary>], iteration_bounds = array<i64: 2, 3>, scalar_prefetch = 0 : i64, scratch_operands = 1 : i64, tpu.core_type = #tpu.core_type<tc>, window_params = [{transform_indices = @transform_0, window_bounds = array<i64: 128, 256>}, {pipeline_mode = #tpu.pipeline_mode<synchronous>, transform_indices = @transform_1, window_bounds = array<i64: 16, 256>}, {transform_indices = @transform_2, window_bounds = array<i64: 128, 16>}, {transform_indices = @transform_3, window_bounds = array<i64: 1, 128>}, {transform_indices = @transform_4, window_bounds = array<i64: 128, 128>}]} {
    %c0_i32 = arith.constant 0 : i32
    %0 = arith.cmpi eq, %arg1, %c0_i32 : i32
    %1 = arith.extui %0 : i1 to i32
    %c0_i32_0 = arith.constant 0 : i32
    %2 = arith.cmpi ne, %1, %c0_i32_0 : i32
    scf.if %2 {
      %c0_8 = arith.constant 0 : index
      %c0_9 = arith.constant 0 : index
      %10 = vector.load %arg2[%c0_8, %c0_9] : memref<128x256xf32, #tpu.memory_space<vmem>>, vector<128x256xf32>
      %c0_10 = arith.constant 0 : index
      %c0_11 = arith.constant 0 : index
      %11 = vector.load %arg3[%c0_10, %c0_11] : memref<16x256xf32, #tpu.memory_space<vmem>>, vector<16x256xf32>
      %cst_12 = arith.constant dense<0.000000e+00> : vector<128x16xf32>
      %12 = tpu.matmul %10, %11, %cst_12 {dimension_numbers = #tpu.dot_dimension_numbers<[1], [1], [0], [0], [0, 0, 1, 0], [], []>} : vector<128x256xf32>, vector<16x256xf32>, vector<128x16xf32> -> vector<128x16xf32>
      %c0_13 = arith.constant 0 : index
      %c0_14 = arith.constant 0 : index
      %13 = vector.load %arg7[%c0_13, %c0_14] : memref<128x16xf32, #tpu.memory_space<vmem>>, vector<128x16xf32>
      tpu.vector_store %arg7[%c0_13, %c0_14], %12 {strides = array<i32>} : memref<128x16xf32, #tpu.memory_space<vmem>>, vector<128x16xf32>,
    } else {
    }
    %c0 = arith.constant 0 : index
    %c0_1 = arith.constant 0 : index
    %3 = vector.load %arg7[%c0, %c0_1] : memref<128x16xf32, #tpu.memory_space<vmem>>, vector<128x16xf32>
    %c0_2 = arith.constant 0 : index
    %c0_3 = arith.constant 0 : index
    %4 = vector.load %arg4[%c0_2, %c0_3] : memref<128x16xf32, #tpu.memory_space<vmem>>, vector<128x16xf32>
    %cst = arith.constant dense<0.000000e+00> : vector<128x128xf32>
    %5 = tpu.matmul %3, %4, %cst {dimension_numbers = #tpu.dot_dimension_numbers<[1], [1], [0], [0], [0, 0, 1, 0], [], []>} : vector<128x16xf32>, vector<128x16xf32>, vector<128x128xf32> -> vector<128x128xf32>
    %c0_4 = arith.constant 0 : index
    %c0_5 = arith.constant 0 : index
    %6 = vector.load %arg5[%c0_4, %c0_5] : memref<1x128xf32, #tpu.memory_space<vmem>>, vector<1x128xf32>
    %7 = vector.broadcast %6 : vector<1x128xf32> to vector<128x128xf32>
    %8 = arith.addf %5, %7 : vector<128x128xf32>
    %c0_6 = arith.constant 0 : index
    %c0_7 = arith.constant 0 : index
    %9 = vector.load %arg6[%c0_6, %c0_7] : memref<128x128xf32, #tpu.memory_space<vmem>>, vector<128x128xf32>
    tpu.vector_store %arg6[%c0_6, %c0_7], %8 {strides = array<i32>} : memref<128x128xf32, #tpu.memory_space<vmem>>, vector<128x128xf32>,
    return
  }
  func.func @transform_0(%arg0: i32, %arg1: i32) -> (i32, i32) {
    %c0_i32 = arith.constant 0 : i32
    %c0_i32_0 = arith.constant 0 : i32
    return %arg0, %c0_i32 : i32, i32
  }
  func.func @transform_1(%arg0: i32, %arg1: i32) -> (i32, i32) {
    %c0_i32 = arith.constant 0 : i32
    %c0_i32_0 = arith.constant 0 : i32
    %c0_i32_1 = arith.constant 0 : i32
    return %c0_i32, %c0_i32_0 : i32, i32
  }
  func.func @transform_2(%arg0: i32, %arg1: i32) -> (i32, i32) {
    %c0_i32 = arith.constant 0 : i32
    %c0_i32_0 = arith.constant 0 : i32
    return %arg1, %c0_i32 : i32, i32
  }
  func.func @transform_3(%arg0: i32, %arg1: i32) -> (i32, i32) {
    %c0_i32 = arith.constant 0 : i32
    %c0_i32_0 = arith.constant 0 : i32
    return %c0_i32, %arg1 : i32, i32
  }
  func.func @transform_4(%arg0: i32, %arg1: i32) -> (i32, i32) {
    %c0_i32 = arith.constant 0 : i32
    return %arg0, %arg1 : i32, i32
  }
}

</mosaic_0001>

<llo_original>
// kernel: tpu_custom_call.1
$region0: #{tpu_custom_call.1}
  #allocation0 [shape = 'u32[]', space=smem, size = 0x4, offset = 0x4, fixed_abs, tag = 'smem constant byte address 0x4 - core index']
  #allocation1 [shape = 'u32[144,128]{1,0:T(1,128)}', space=vmem, size = 0x12000, scoped, tag = 'internal scratch']
  #allocation2 [shape = 'f32[128,16]{1,0:T(8,128)}', space=vmem, size = 0x10000, scoped, tag = 'scratch operand']
  %s0 = inlined_call_operand.hbm [shape: f32[256,256], index: 0, kind: input, shape index: {}]
  %s1 = inlined_call_operand.vmem [shape: f32[16,256], index: 1, kind: input, shape index: {}]
  %s2 = inlined_call_operand.vmem [shape: f32[384,16], index: 2, kind: input, shape index: {}]
  %s3 = inlined_call_operand.vmem [shape: f32[1,384], index: 3, kind: input, shape index: {}]
  %s4 = inlined_call_operand.hbm [shape: f32[256,384], index: 4, kind: output, shape index: {}]
  %s5 = sld [smem:[#allocation0]]
  $region57: #{tpu_custom_call.1} parent=0
    _
  %s7 = ssub.s32 1, %s5
  %s8 = scalar_select 0, %s7, %s5
  $region1: #{tpu_custom_call.1} parent=0
    #allocation3 [shape = 'u8[262144]{0}', space=vmem, size = 0x40000, scoped, tag = 'input window, operand 0']
    #allocation4 [shape = 's32[2]{0}', space=sflag, size = 0x8, scoped, tag = 'scoped memory for tpu_custom_call.1']
    #allocation5 [shape = 's32[2]{0}', space=sflag, size = 0x8, scoped, tag = 'scoped memory for tpu_custom_call.1']
    #allocation6 [shape = 'u8[131072]{0}', space=vmem, size = 0x20000, scoped, tag = 'output window, operand 0']
    %9 = vsyncpa [#allocation4], 0
    %s10 = scalar_lea.sflag [#allocation4], 1
    %11 = vsyncpa %s10, 0
    %12 = vsyncpa [#allocation5], 0
    %s13 = scalar_lea.sflag [#allocation5], 1
    %14 = vsyncpa %s13, 0
    loop: start=0, step=1, limit=8
    $region2: #{tpu_custom_call.1} parent=1 // loop_pre_header
      _
    $region3: #{tpu_custom_call.1} parent=1 // loop_header
      %s16 = sphi 0, %s20
      %p17 = scmp.ge.s32.totalorder %s16, 8
      %s23 = sphi 0, %s35
      %s24 = sphi 0, %s31
      %s25 = sphi 0, %s23
      %s26 = sphi 0, %s24
      %s27 = sphi 0, %s25
      %s28 = sphi 0, %s26
      %s38 = sphi 0, %s40
      %s41 = sphi 0, %s38
      %s42 = sphi 0, %s41
      %s58 = sphi 0, %s42
      %s62 = sphi 0, %s62
      %s64 = sphi 0, %s62
      %s65 = sphi 0, %s64
      %s79 = sphi 0, %s65
      %s85 = sphi 0, %s87
      %s88 = sphi 0, %s85
      %s89 = sphi 0, %s88
      %s105 = sphi 0, %s89
      %s111 = sphi 0, %s113
      %s114 = sphi 0, %s111
      %s115 = sphi 0, %s114
      %s131 = sphi 0, %s115
      %s139 = sphi 0, %s141
      %s142 = sphi 0, %s139
      %s143 = sphi 0, %s142
      %s159 = sphi 0, %s143
    $region4: #{tpu_custom_call.1} parent=1 // loop_header_branch
      %19 = sbr.rel (%p17) target = $region8
    $region5: #{tpu_custom_call.1} parent=1 // loop_body
      %s21 = ssub.s32 %s16, 1
      %s22 = ssub.s32 %s16, 2
      %s29 = sadd.s32 1, %s24
      %p30 = scmp.ge.s32.totalorder %s29, 3
      %s31 = scalar_select %p30, 0, %s29
      %s32 = sadd.s32 1, %s23
      %s33 = scalar_select %p30, %s32, %s23
      %p34 = scmp.ge.s32.totalorder %s33, 2
      %s35 = scalar_select %p34, 0, %s33
      %s36 = ssub.s32 %s23, %s35
      %p37 = scmp.eq.s32.totalorder %s36, 0
      %s39 = sadd.s32 %s38, 1
      %s40 = scalar_select %p37, %s38, %s39
      %p43 = pneg %p37
      %p44 = scmp.eq.s32.totalorder %s16, 5
      %p45 = por %p43, %p44
      %p46 = scmp.ne.s32.totalorder %s38, %s41
      %p47 = scmp.eq.s32.totalorder %s16, 0
      %p48 = por %p46, %p47
      %p49 = scmp.ne.s32.totalorder %s38, %s41
      %p50 = scmp.eq.s32.totalorder %s21, 5
      %p51 = por %p49, %p50
      %p52 = scmp.ne.s32.totalorder %s41, %s42
      %p53 = scmp.eq.s32.totalorder %s21, 0
      %p54 = por %p52, %p53
      %p55 = scmp.ne.s32.totalorder %s41, %s42
      %p56 = scmp.eq.s32.totalorder %s22, 5
      %p57 = por %p55, %p56
      %p59 = scmp.ne.s32.totalorder %s42, %s58
      %p60 = scmp.eq.s32.totalorder %s22, 0
      %p61 = por %p59, %p60
      %s63 = sadd.s32 %s62, 1
      %p66 = scmp.eq.s32.totalorder %s16, 5
      %p67 = scmp.ne.s32.totalorder %s62, %s64
      %p68 = scmp.eq.s32.totalorder %s16, 0
      %p69 = por %p67, %p68
      %p70 = scmp.ne.s32.totalorder %s62, %s64
      %p71 = scmp.eq.s32.totalorder %s21, 5
      %p72 = por %p70, %p71
      %p73 = scmp.ne.s32.totalorder %s64, %s65
      %p74 = scmp.eq.s32.totalorder %s21, 0
      %p75 = por %p73, %p74
      %p76 = scmp.ne.s32.totalorder %s64, %s65
      %p77 = scmp.eq.s32.totalorder %s22, 5
      %p78 = por %p76, %p77
      %p80 = scmp.ne.s32.totalorder %s65, %s79
      %p81 = scmp.eq.s32.totalorder %s22, 0
      %p82 = por %p80, %p81
      %s83 = ssub.s32 %s24, %s31
      %p84 = scmp.eq.s32.totalorder %s83, 0
      %s86 = sadd.s32 %s85, 1
      %s87 = scalar_select %p84, %s85, %s86
      %p90 = pneg %p84
      %p91 = scmp.eq.s32.totalorder %s16, 5
      %p92 = por %p90, %p91
      %p93 = scmp.ne.s32.totalorder %s85, %s88
      %p94 = scmp.eq.s32.totalorder %s16, 0
      %p95 = por %p93, %p94
      %p96 = scmp.ne.s32.totalorder %s85, %s88
      %p97 = scmp.eq.s32.totalorder %s21, 5
      %p98 = por %p96, %p97
      %p99 = scmp.ne.s32.totalorder %s88, %s89
      %p100 = scmp.eq.s32.totalorder %s21, 0
      %p101 = por %p99, %p100
      %p102 = scmp.ne.s32.totalorder %s88, %s89
      %p103 = scmp.eq.s32.totalorder %s22, 5
      %p104 = por %p102, %p103
      %p106 = scmp.ne.s32.totalorder %s89, %s105
      %p107 = scmp.eq.s32.totalorder %s22, 0
      %p108 = por %p106, %p107
      %s109 = ssub.s32 %s24, %s31
      %p110 = scmp.eq.s32.totalorder %s109, 0
      %s112 = sadd.s32 %s111, 1
      %s113 = scalar_select %p110, %s111, %s112
      %p116 = pneg %p110
      %p117 = scmp.eq.s32.totalorder %s16, 5
      %p118 = por %p116, %p117
      %p119 = scmp.ne.s32.totalorder %s111, %s114
      %p120 = scmp.eq.s32.totalorder %s16, 0
      %p121 = por %p119, %p120
      %p122 = scmp.ne.s32.totalorder %s111, %s114
      %p123 = scmp.eq.s32.totalorder %s21, 5
      %p124 = por %p122, %p123
      %p125 = scmp.ne.s32.totalorder %s114, %s115
      %p126 = scmp.eq.s32.totalorder %s21, 0
      %p127 = por %p125, %p126
      %p128 = scmp.ne.s32.totalorder %s114, %s115
      %p129 = scmp.eq.s32.totalorder %s22, 5
      %p130 = por %p128, %p129
      %p132 = scmp.ne.s32.totalorder %s115, %s131
      %p133 = scmp.eq.s32.totalorder %s22, 0
      %p134 = por %p132, %p133
      %s135 = ssub.s32 %s23, %s35
      %s136 = ssub.s32 %s24, %s31
      %s137 = sor.u32 %s135, %s136
      %p138 = scmp.eq.s32.totalorder %s137, 0
      %s140 = sadd.s32 %s139, 1
      %s141 = scalar_select %p138, %s139, %s140
      %p144 = pneg %p138
      %p145 = scmp.eq.s32.totalorder %s16, 5
      %p146 = por %p144, %p145
      %p147 = scmp.ne.s32.totalorder %s139, %s142
      %p148 = scmp.eq.s32.totalorder %s16, 0
      %p149 = por %p147, %p148
      %p150 = scmp.ne.s32.totalorder %s139, %s142
      %p151 = scmp.eq.s32.totalorder %s21, 5
      %p152 = por %p150, %p151
      %p153 = scmp.ne.s32.totalorder %s142, %s143
      %p154 = scmp.eq.s32.totalorder %s21, 0
      %p155 = por %p153, %p154
      %p156 = scmp.ne.s32.totalorder %s142, %s143
      %p157 = scmp.eq.s32.totalorder %s22, 5
      %p158 = por %p156, %p157
      %p160 = scmp.ne.s32.totalorder %s143, %s159
      %p161 = scmp.eq.s32.totalorder %s22, 0
      %p162 = por %p160, %p161
      %p163 = scmp.le.s32.totalorder 1, %s16
      %p164 = scmp.lt.s32.totalorder %s16, 7
      %p165 = pnand %p163, %p164
      %p166 = pneg %p165
      // Predicated region
      $region9: #{tpu_custom_call.1} parent=5 // pred_check
        _
      $region10: #{tpu_custom_call.1} parent=5 // pred_check_branch
        %168 = sbr.rel (%p165) target = $region12
      $region11: #{tpu_custom_call.1} parent=5 // pred_region
        %s169 = ssub.s32 %s16, 1
        // Predicated region
        $region13: #{tpu_custom_call.1} parent=11 // pred_check
          %p170 = pneg %p75
        $region14: #{tpu_custom_call.1} parent=11 // pred_check_branch
          %172 = sbr.rel (%p170) target = $region16
        $region15: #{tpu_custom_call.1} parent=11 // pred_region
          _
        $region16: #{tpu_custom_call.1} parent=11 // pred_fallthru
          _
      $region12: #{tpu_custom_call.1} parent=5 // pred_fallthru
        _
      %p173 = scmp.lt.s32.totalorder %s16, 6
      // Predicated region
      $region17: #{tpu_custom_call.1} parent=5 // pred_check
        %p174 = pneg %p173
      $region18: #{tpu_custom_call.1} parent=5 // pred_check_branch
        %176 = sbr.rel (%p174) target = $region20
      $region19: #{tpu_custom_call.1} parent=5 // pred_region
        // Predicated region
        $region21: #{tpu_custom_call.1} parent=19 // pred_check
          %p177 = pneg %p48
        $region22: #{tpu_custom_call.1} parent=19 // pred_check_branch
          %179 = sbr.rel (%p177) target = $region24
        $region23: #{tpu_custom_call.1} parent=19 // pred_region
          %s180 = sand.u32 %s38, 1
          %s181 = scalar_lea.sflag [#allocation4], %s180
          %s182 = sand.u32 %s38, 1
          %s183 = smul.addr %s182, 256
          %s184 = scalar_lea.vmem [#allocation3], %s183
          %s185 = smul.u32 16, %s23
          %s187 = ssub.s32 4096, 4096
          %188 = vsyncadd %s181, %s187
          %s189 = smul.addr %s185, 2
          %s190 = smul.addr %s189, 128
          %s191 = scalar_lea.hbm %s0, %s190
          %s192 = sshll.u32 %s184, 4
          %s193 = int_to_ptr.vmem [resolvable:$true] %s192
          %198 = dma.hbm_to_vmem [thread:$0]  %s191, 4096, %s193, %s181, 256, 256, 16
        $region24: #{tpu_custom_call.1} parent=19 // pred_fallthru
          _
        // Predicated region
        $region25: #{tpu_custom_call.1} parent=19 // pred_check
          %p199 = pneg %p95
        $region26: #{tpu_custom_call.1} parent=19 // pred_check_branch
          %201 = sbr.rel (%p199) target = $region28
        $region27: #{tpu_custom_call.1} parent=19 // pred_region
          %s202 = smul.u32 16, %s24
          %p203 = scmp.lt.s32.totalorder %s202, 47
          %s204 = scalar_select %p203, %s202, 47
          %s205 = smul.addr %s204, 8
          %s206 = scalar_lea.vmem %s2, %s205
          %s207 = smul.u32 16, %s24
        $region28: #{tpu_custom_call.1} parent=19 // pred_fallthru
          _
        // Predicated region
        $region29: #{tpu_custom_call.1} parent=19 // pred_check
          %p208 = pneg %p121
        $region30: #{tpu_custom_call.1} parent=19 // pred_check_branch
          %210 = sbr.rel (%p208) target = $region32
        $region31: #{tpu_custom_call.1} parent=19 // pred_region
          %p211 = scmp.lt.s32.totalorder %s24, 2
          %s212 = scalar_select %p211, %s24, 2
          %s213 = scalar_lea.vmem %s3, %s212
        $region32: #{tpu_custom_call.1} parent=19 // pred_fallthru
          _
      $region20: #{tpu_custom_call.1} parent=5 // pred_fallthru
        _
      %p214 = scmp.le.s32.totalorder 1, %s16
      %p215 = scmp.lt.s32.totalorder %s16, 7
      %p216 = pnand %p214, %p215
      %p217 = pneg %p216
      // Predicated region
      $region33: #{tpu_custom_call.1} parent=5 // pred_check
        _
      $region34: #{tpu_custom_call.1} parent=5 // pred_check_branch
        %219 = sbr.rel (%p216) target = $region36
      $region35: #{tpu_custom_call.1} parent=5 // pred_region
        %s220 = ssub.s32 %s16, 1
        %s221 = sand.u32 %s41, 1
        %s222 = scalar_lea.sflag [#allocation4], %s221
        %s223 = sand.u32 %s41, 1
        %s224 = smul.addr %s223, 256
        %s225 = scalar_lea.vmem [#allocation3], %s224
        // Predicated region
        $region37: #{tpu_custom_call.1} parent=35 // pred_check
          %p226 = pneg %p54
        $region38: #{tpu_custom_call.1} parent=35 // pred_check_branch
          %228 = sbr.rel (%p226) target = $region40
        $region39: #{tpu_custom_call.1} parent=35 // pred_region
          %229 = dma.done %s222, 4096
        $region40: #{tpu_custom_call.1} parent=35 // pred_fallthru
          _
        %s230 = sand.u32 %s41, 1
        %s231 = scalar_lea.sflag [#allocation4], %s230
        %s232 = sand.u32 %s41, 1
        %s233 = smul.addr %s232, 256
        %s234 = scalar_lea.vmem [#allocation3], %s233
        %p235 = pneg %p54
        %p236 = pneg %p51
        %p237 = pneg %p75
        %p238 = pneg %p72
        %s239 = smul.u32 16, %s26
        %p240 = scmp.lt.s32.totalorder %s239, 47
        %s241 = scalar_select %p240, %s239, 47
        %s242 = smul.addr %s241, 8
        %s243 = scalar_lea.vmem %s2, %s242
        %p244 = pneg %p101
        %p245 = pneg %p98
        %p246 = scmp.lt.s32.totalorder %s26, 2
        %s247 = scalar_select %p246, %s26, 2
        %s248 = scalar_lea.vmem %s3, %s247
        %p249 = pneg %p127
        %p250 = pneg %p124
        %p251 = pneg %p155
        %p252 = pneg %p152
        %s253 = sand.u32 %s142, 1
        %s254 = scalar_lea.sflag [#allocation5], %s253
        %s255 = sand.u32 %s142, 1
        %s256 = smul.addr %s255, 128
        %s257 = scalar_lea.vmem [#allocation6], %s256
        %s258 = smul.u32 16, %s25
        %s259 = smul.u32 16, %s26
        %p260 = scmp.lt.s32.totalorder %s259, 47
        %s261 = scalar_select %p260, %s259, 47
        %s262 = smul.addr %s261, 8
        %s263 = scalar_lea.vmem %s2, %s262
        %s264 = smul.u32 16, %s26
        %p265 = scmp.lt.s32.totalorder %s26, 2
        %s266 = scalar_select %p265, %s26, 2
        %s267 = scalar_lea.vmem %s3, %s266
        %s268 = smul.u32 16, %s25
        %p269 = scmp.eq.s32.totalorder %s26, 0
        // Predicated region
        $region41: #{tpu_custom_call.1} parent=35 // pred_check
          %p270 = pneg %p269
        $region42: #{tpu_custom_call.1} parent=35 // pred_check_branch
          %272 = sbr.rel (%p270) target = $region44
        $region43: #{tpu_custom_call.1} parent=35 // pred_region
          %v273 = vld [vmem:[%s225] sm:$0xff]
          %v274 = vld [vmem:[%s225 + $0x8] sm:$0xff]
          %v275 = vld [vmem:[%s225 + $0x10] sm:$0xff]
          %v276 = vld [vmem:[%s225 + $0x18] sm:$0xff]
          %v277 = vld [vmem:[%s225 + $0x20] sm:$0xff]
          %v278 = vld [vmem:[%s225 + $0x28] sm:$0xff]
          %v279 = vld [vmem:[%s225 + $0x30] sm:$0xff]
          %v280 = vld [vmem:[%s225 + $0x38] sm:$0xff]
          %v281 = vld [vmem:[%s225 + $0x40] sm:$0xff]
          %v282 = vld [vmem:[%s225 + $0x48] sm:$0xff]
          %v283 = vld [vmem:[%s225 + $0x50] sm:$0xff]
          %v284 = vld [vmem:[%s225 + $0x58] sm:$0xff]
          %v285 = vld [vmem:[%s225 + $0x60] sm:$0xff]
          %v286 = vld [vmem:[%s225 + $0x68] sm:$0xff]
          %v287 = vld [vmem:[%s225 + $0x70] sm:$0xff]
          %v288 = vld [vmem:[%s225 + $0x78] sm:$0xff]
          %v289 = vld [vmem:[%s225 + $0x80] sm:$0xff]
          %v290 = vld [vmem:[%s225 + $0x88] sm:$0xff]
          %v291 = vld [vmem:[%s225 + $0x90] sm:$0xff]
          %v292 = vld [vmem:[%s225 + $0x98] sm:$0xff]
          %v293 = vld [vmem:[%s225 + $0xa0] sm:$0xff]
          %v294 = vld [vmem:[%s225 + $0xa8] sm:$0xff]
          %v295 = vld [vmem:[%s225 + $0xb0] sm:$0xff]
          %v296 = vld [vmem:[%s225 + $0xb8] sm:$0xff]
          %v297 = vld [vmem:[%s225 + $0xc0] sm:$0xff]
          %v298 = vld [vmem:[%s225 + $0xc8] sm:$0xff]
          %v299 = vld [vmem:[%s225 + $0xd0] sm:$0xff]
          %v300 = vld [vmem:[%s225 + $0xd8] sm:$0xff]
          %v301 = vld [vmem:[%s225 + $0xe0] sm:$0xff]
          %v302 = vld [vmem:[%s225 + $0xe8] sm:$0xff]
          %v303 = vld [vmem:[%s225 + $0xf0] sm:$0xff]
          %v304 = vld [vmem:[%s225 + $0xf8] sm:$0xff]
          %v305 = vld [vmem:[%s1] sm:$0xff]
          %v306 = vld [vmem:[%s1 + $0x8] sm:$0xff]
          %v307 = vld [vmem:[%s1 + $0x10] sm:$0xff]
          %v308 = vld [vmem:[%s1 + $0x18] sm:$0xff]
          %309 = vmatprep.subr.mxu0 %v306
          %310 = vmatpush1.xpose.msra.mxu0 %v305
          %311 = vmatprep.subr.mxu0 %v308
          %312 = vmatpush1.xpose.msra.mxu0 %v307
          %313 = vmatprep.subr.mxu0 0.0
          %314 = vmatpush1.xpose.msra.mxu0 0.0
          %315 = vmatprep.subr.mxu0 0.0
          %316 = vmatpush1.xpose.msra.mxu0 0.0
          %317 = vmatprep.subr.mxu0 0.0
          %318 = vmatpush1.xpose.msra.mxu0 0.0
          %319 = vmatprep.subr.mxu0 0.0
          %320 = vmatpush1.xpose.msra.mxu0 0.0
          %321 = vmatprep.subr.mxu0 0.0
          %322 = vmatpush1.xpose.msra.mxu0 0.0
          %323 = vmatprep.subr.mxu0 0.0
          %324 = vmatpush1.xpose.msra.mxu0 0.0
          %325 = vmatprep.subr.mxu0 0.0
          %326 = vmatpush1.xpose.msra.mxu0 0.0
          %327 = vmatprep.subr.mxu0 0.0
          %328 = vmatpush1.xpose.msra.mxu0 0.0
          %329 = vmatprep.subr.mxu0 0.0
          %330 = vmatpush1.xpose.msra.mxu0 0.0
          %331 = vmatprep.subr.mxu0 0.0
          %332 = vmatpush1.xpose.msra.mxu0 0.0
          %333 = vmatprep.subr.mxu0 0.0
          %334 = vmatpush1.xpose.msra.mxu0 0.0
          %335 = vmatprep.subr.mxu0 0.0
          %336 = vmatpush1.xpose.msra.mxu0 0.0
          %337 = vmatprep.subr.mxu0 0.0
          %338 = vmatpush1.xpose.msra.mxu0 0.0
          %339 = vmatprep.subr.mxu0 0.0
          %340 = vmatpush1.xpose.msra.mxu0 0.0
          %341 = vmatprep.subr.mxu0 0.0
          %342 = vmatpush1.xpose.msra.mxu0 0.0
          %343 = vmatprep.subr.mxu0 0.0
          %344 = vmatpush1.xpose.msra.mxu0 0.0
          %345 = vmatprep.subr.mxu0 0.0
          %346 = vmatpush1.xpose.msra.mxu0 0.0
          %347 = vmatprep.subr.mxu0 0.0
          %348 = vmatpush1.xpose.msra.mxu0 0.0
          %349 = vmatprep.subr.mxu0 0.0
          %350 = vmatpush1.xpose.msra.mxu0 0.0
          %351 = vmatprep.subr.mxu0 0.0
          %352 = vmatpush1.xpose.msra.mxu0 0.0
          %353 = vmatprep.subr.mxu0 0.0
          %354 = vmatpush1.xpose.msra.mxu0 0.0
          %355 = vmatprep.subr.mxu0 0.0
          %356 = vmatpush1.xpose.msra.mxu0 0.0
          %357 = vmatprep.subr.mxu0 0.0
          %358 = vmatpush1.xpose.msra.mxu0 0.0
          %359 = vmatprep.subr.mxu0 0.0
          %360 = vmatpush1.xpose.msra.mxu0 0.0
          %361 = vmatprep.subr.mxu0 0.0
          %362 = vmatpush1.xpose.msra.mxu0 0.0
          %363 = vmatprep.subr.mxu0 0.0
          %364 = vmatpush1.xpose.msra.mxu0 0.0
          %365 = vmatprep.subr.mxu0 0.0
          %366 = vmatpush1.xpose.msra.mxu0 0.0
          %367 = vmatprep.subr.mxu0 0.0
          %368 = vmatpush1.xpose.msra.mxu0 0.0
          %369 = vmatprep.subr.mxu0 0.0
          %370 = vmatpush1.xpose.msra.mxu0 0.0
          %371 = vmatprep.subr.mxu0 0.0
          %372 = vmatpush1.xpose.msra.mxu0 0.0
          %373 = vmatprep.mubr.f32.mxu0 %v274
          %374 = vmatmul.mubr.f32.gmra.mrb[0].mxu0 %v273
          %v375 = vpop.f32.mrb[0].mxu0
          %v376 = vadd.f32 0.0, %v375
          %v377 = vpop.f32.mrb[0].mxu0
          %378 = vmatprep.mubr.f32.mxu0 %v276
          %379 = vmatmul.mubr.f32.gmra.mrb[0].mxu0 %v275
          %v380 = vpop.f32.mrb[0].mxu0
          %v381 = vadd.f32 0.0, %v380
          %v382 = vpop.f32.mrb[0].mxu0
          %383 = vmatprep.mubr.f32.mxu0 %v278
          %384 = vmatmul.mubr.f32.gmra.mrb[0].mxu0 %v277
          %v385 = vpop.f32.mrb[0].mxu0
          %v386 = vadd.f32 0.0, %v385
          %v387 = vpop.f32.mrb[0].mxu0
          %388 = vmatprep.mubr.f32.mxu0 %v280
          %389 = vmatmul.mubr.f32.gmra.mrb[0].mxu0 %v279
          %v390 = vpop.f32.mrb[0].mxu0
          %v391 = vadd.f32 0.0, %v390
          %v392 = vpop.f32.mrb[0].mxu0
          %393 = vmatprep.mubr.f32.mxu0 %v282
          %394 = vmatmul.mubr.f32.gmra.mrb[0].mxu0 %v281
          %v395 = vpop.f32.mrb[0].mxu0
          %v396 = vadd.f32 0.0, %v395
          %v397 = vpop.f32.mrb[0].mxu0
          %398 = vmatprep.mubr.f32.mxu0 %v284
          %399 = vmatmul.mubr.f32.gmra.mrb[0].mxu0 %v283
          %v400 = vpop.f32.mrb[0].mxu0
          %v401 = vadd.f32 0.0, %v400
          %v402 = vpop.f32.mrb[0].mxu0
          %403 = vmatprep.mubr.f32.mxu0 %v286
          %404 = vmatmul.mubr.f32.gmra.mrb[0].mxu0 %v285
          %v405 = vpop.f32.mrb[0].mxu0
          %v406 = vadd.f32 0.0, %v405
          %v407 = vpop.f32.mrb[0].mxu0
          %408 = vmatprep.mubr.f32.mxu0 %v288
          %409 = vmatmul.mubr.f32.gmra.mrb[0].mxu0 %v287
          %v410 = vpop.f32.mrb[0].mxu0
          %v411 = vadd.f32 0.0, %v410
          %v412 = vpop.f32.mrb[0].mxu0
          %413 = vmatprep.mubr.f32.mxu0 %v290
          %414 = vmatmul.mubr.f32.gmra.mrb[0].mxu0 %v289
          %v415 = vpop.f32.mrb[0].mxu0
          %v416 = vadd.f32 0.0, %v415
          %v417 = vpop.f32.mrb[0].mxu0
          %418 = vmatprep.mubr.f32.mxu0 %v292
          %419 = vmatmul.mubr.f32.gmra.mrb[0].mxu0 %v291
          %v420 = vpop.f32.mrb[0].mxu0
          %v421 = vadd.f32 0.0, %v420
          %v422 = vpop.f32.mrb[0].mxu0
          %423 = vmatprep.mubr.f32.mxu0 %v294
          %424 = vmatmul.mubr.f32.gmra.mrb[0].mxu0 %v293
          %v425 = vpop.f32.mrb[0].mxu0
          %v426 = vadd.f32 0.0, %v425
          %v427 = vpop.f32.mrb[0].mxu0
          %428 = vmatprep.mubr.f32.mxu0 %v296
          %429 = vmatmul.mubr.f32.gmra.mrb[0].mxu0 %v295
          %v430 = vpop.f32.mrb[0].mxu0
          %v431 = vadd.f32 0.0, %v430
          %v432 = vpop.f32.mrb[0].mxu0
          %433 = vmatprep.mubr.f32.mxu0 %v298
          %434 = vmatmul.mubr.f32.gmra.mrb[0].mxu0 %v297
          %v435 = vpop.f32.mrb[0].mxu0
          %v436 = vadd.f32 0.0, %v435
          %v437 = vpop.f32.mrb[0].mxu0
          %438 = vmatprep.mubr.f32.mxu0 %v300
          %439 = vmatmul.mubr.f32.gmra.mrb[0].mxu0 %v299
          %v440 = vpop.f32.mrb[0].mxu0
          %v441 = vadd.f32 0.0, %v440
          %v442 = vpop.f32.mrb[0].mxu0
          %443 = vmatprep.mubr.f32.mxu0 %v302
          %444 = vmatmul.mubr.f32.gmra.mrb[0].mxu0 %v301
          %v445 = vpop.f32.mrb[0].mxu0
          %v446 = vadd.f32 0.0, %v445
          %v447 = vpop.f32.mrb[0].mxu0
          %448 = vmatprep.mubr.f32.mxu0 %v304
          %449 = vmatmul.mubr.f32.gmra.mrb[0].mxu0 %v303
          %v450 = vpop.f32.mrb[0].mxu0
          %v451 = vadd.f32 0.0, %v450
          %v452 = vpop.f32.mrb[0].mxu0
          %453 = vdwg.mxu0
          %vm454 = vcmask 130048
          %455 = vst.msk [vmem:[#allocation2] sm:$0xff] %vm454, %v376
          %456 = vst.msk [vmem:[#allocation2 + $0x8] sm:$0xff] %vm454, %v381
          %457 = vst.msk [vmem:[#allocation2 + $0x10] sm:$0xff] %vm454, %v386
          %458 = vst.msk [vmem:[#allocation2 + $0x18] sm:$0xff] %vm454, %v391
          %459 = vst.msk [vmem:[#allocation2 + $0x20] sm:$0xff] %vm454, %v396
          %460 = vst.msk [vmem:[#allocation2 + $0x28] sm:$0xff] %vm454, %v401
          %461 = vst.msk [vmem:[#allocation2 + $0x30] sm:$0xff] %vm454, %v406
          %462 = vst.msk [vmem:[#allocation2 + $0x38] sm:$0xff] %vm454, %v411
          %463 = vst.msk [vmem:[#allocation2 + $0x40] sm:$0xff] %vm454, %v416
          %464 = vst.msk [vmem:[#allocation2 + $0x48] sm:$0xff] %vm454, %v421
          %465 = vst.msk [vmem:[#allocation2 + $0x50] sm:$0xff] %vm454, %v426
          %466 = vst.msk [vmem:[#allocation2 + $0x58] sm:$0xff] %vm454, %v431
          %467 = vst.msk [vmem:[#allocation2 + $0x60] sm:$0xff] %vm454, %v436
          %468 = vst.msk [vmem:[#allocation2 + $0x68] sm:$0xff] %vm454, %v441
          %469 = vst.msk [vmem:[#allocation2 + $0x70] sm:$0xff] %vm454, %v446
          %470 = vst.msk [vmem:[#allocation2 + $0x78] sm:$0xff] %vm454, %v451
        $region44: #{tpu_custom_call.1} parent=35 // pred_fallthru
          _
        %v471 = vld [vmem:[#allocation2] sm:$0xff]
        %v472 = vld [vmem:[#allocation2 + $0x8] sm:$0xff]
        %v473 = vld [vmem:[#allocation2 + $0x10] sm:$0xff]
        %v474 = vld [vmem:[#allocation2 + $0x18] sm:$0xff]
        %v475 = vld [vmem:[#allocation2 + $0x20] sm:$0xff]
        %v476 = vld [vmem:[#allocation2 + $0x28] sm:$0xff]
        %v477 = vld [vmem:[#allocation2 + $0x30] sm:$0xff]
        %v478 = vld [vmem:[#allocation2 + $0x38] sm:$0xff]
        %v479 = vld [vmem:[#allocation2 + $0x40] sm:$0xff]
        %v480 = vld [vmem:[#allocation2 + $0x48] sm:$0xff]
        %v481 = vld [vmem:[#allocation2 + $0x50] sm:$0xff]
        %v482 = vld [vmem:[#allocation2 + $0x58] sm:$0xff]
        %v483 = vld [vmem:[#allocation2 + $0x60] sm:$0xff]
        %v484 = vld [vmem:[#allocation2 + $0x68] sm:$0xff]
        %v485 = vld [vmem:[#allocation2 + $0x70] sm:$0xff]
        %v486 = vld [vmem:[#allocation2 + $0x78] sm:$0xff]
        %v487 = vld [vmem:[%s263] sm:$0xff]
        %v488 = vld [vmem:[%s263 + $0x8] sm:$0xff]
        %v489 = vld [vmem:[%s263 + $0x10] sm:$0xff]
        %v490 = vld [vmem:[%s263 + $0x18] sm:$0xff]
        %v491 = vld [vmem:[%s263 + $0x20] sm:$0xff]
        %v492 = vld [vmem:[%s263 + $0x28] sm:$0xff]
        %v493 = vld [vmem:[%s263 + $0x30] sm:$0xff]
        %v494 = vld [vmem:[%s263 + $0x38] sm:$0xff]
        %v495 = vld [vmem:[%s263 + $0x40] sm:$0xff]
        %v496 = vld [vmem:[%s263 + $0x48] sm:$0xff]
        %v497 = vld [vmem:[%s263 + $0x50] sm:$0xff]
        %v498 = vld [vmem:[%s263 + $0x58] sm:$0xff]
        %v499 = vld [vmem:[%s263 + $0x60] sm:$0xff]
        %v500 = vld [vmem:[%s263 + $0x68] sm:$0xff]
        %v501 = vld [vmem:[%s263 + $0x70] sm:$0xff]
        %v502 = vld [vmem:[%s263 + $0x78] sm:$0xff]
        %v503 = vld [vmem:[%s267] sm:$0x1]
        %v505 = vlaneseq
        %v506 = vshrl.u32 %v505, 7
        %v507 = vsub.s32 0, %v506
        %v508 = vrot.slane %v503, %v507
        %vm510 = vcmask 130048
        %v512 = vsel %vm510, %v471, 0
        %v515 = vsel %vm510, %v472, 0
        %v518 = vsel %vm510, %v473, 0
        %v521 = vsel %vm510, %v474, 0
        %v524 = vsel %vm510, %v475, 0
        %v527 = vsel %vm510, %v476, 0
        %v530 = vsel %vm510, %v477, 0
        %v533 = vsel %vm510, %v478, 0
        %v536 = vsel %vm510, %v479, 0
        %v539 = vsel %vm510, %v480, 0
        %v542 = vsel %vm510, %v481, 0
        %v545 = vsel %vm510, %v482, 0
        %v548 = vsel %vm510, %v483, 0
        %v551 = vsel %vm510, %v484, 0
        %v554 = vsel %vm510, %v485, 0
        %v557 = vsel %vm510, %v486, 0
        %v560 = vsel %vm510, %v487, 0
        %v563 = vsel %vm510, %v488, 0
        %v566 = vsel %vm510, %v489, 0
        %v569 = vsel %vm510, %v490, 0
        %v572 = vsel %vm510, %v491, 0
        %v575 = vsel %vm510, %v492, 0
        %v578 = vsel %vm510, %v493, 0
        %v581 = vsel %vm510, %v494, 0
        %v584 = vsel %vm510, %v495, 0
        %v587 = vsel %vm510, %v496, 0
        %v590 = vsel %vm510, %v497, 0
        %v593 = vsel %vm510, %v498, 0
        %v596 = vsel %vm510, %v499, 0
        %v599 = vsel %vm510, %v500, 0
        %v602 = vsel %vm510, %v501, 0
        %v605 = vsel %vm510, %v502, 0
        %607 = vmatprep.subr.mxu0 0.0
        %608 = vmatpush1.xpose.msra.mxu0 %v560
        %609 = vmatprep.subr.mxu0 0.0
        %610 = vmatpush1.xpose.msra.mxu0 %v563
        %611 = vmatprep.subr.mxu0 0.0
        %612 = vmatpush1.xpose.msra.mxu0 %v566
        %613 = vmatprep.subr.mxu0 0.0
        %614 = vmatpush1.xpose.msra.mxu0 %v569
        %615 = vmatprep.subr.mxu0 0.0
        %616 = vmatpush1.xpose.msra.mxu0 %v572
        %617 = vmatprep.subr.mxu0 0.0
        %618 = vmatpush1.xpose.msra.mxu0 %v575
        %619 = vmatprep.subr.mxu0 0.0
        %620 = vmatpush1.xpose.msra.mxu0 %v578
        %621 = vmatprep.subr.mxu0 0.0
        %622 = vmatpush1.xpose.msra.mxu0 %v581
        %623 = vmatprep.subr.mxu0 0.0
        %624 = vmatpush1.xpose.msra.mxu0 %v584
        %625 = vmatprep.subr.mxu0 0.0
        %626 = vmatpush1.xpose.msra.mxu0 %v587
        %627 = vmatprep.subr.mxu0 0.0
        %628 = vmatpush1.xpose.msra.mxu0 %v590
        %629 = vmatprep.subr.mxu0 0.0
        %630 = vmatpush1.xpose.msra.mxu0 %v593
        %631 = vmatprep.subr.mxu0 0.0
        %632 = vmatpush1.xpose.msra.mxu0 %v596
        %633 = vmatprep.subr.mxu0 0.0
        %634 = vmatpush1.xpose.msra.mxu0 %v599
        %635 = vmatprep.subr.mxu0 0.0
        %636 = vmatpush1.xpose.msra.mxu0 %v602
        %637 = vmatprep.subr.mxu0 0.0
        %638 = vmatpush1.xpose.msra.mxu0 %v605
        %639 = vmatprep.subr.mxu0 0.0
        %640 = vmatpush1.xpose.msra.mxu0 0.0
        %641 = vmatprep.subr.mxu0 0.0
        %642 = vmatpush1.xpose.msra.mxu0 0.0
        %643 = vmatprep.subr.mxu0 0.0
        %644 = vmatpush1.xpose.msra.mxu0 0.0
        %645 = vmatprep.subr.mxu0 0.0
        %646 = vmatpush1.xpose.msra.mxu0 0.0
        %647 = vmatprep.subr.mxu0 0.0
        %648 = vmatpush1.xpose.msra.mxu0 0.0
        %649 = vmatprep.subr.mxu0 0.0
        %650 = vmatpush1.xpose.msra.mxu0 0.0
        %651 = vmatprep.subr.mxu0 0.0
        %652 = vmatpush1.xpose.msra.mxu0 0.0
        %653 = vmatprep.subr.mxu0 0.0
        %654 = vmatpush1.xpose.msra.mxu0 0.0
        %655 = vmatprep.subr.mxu0 0.0
        %656 = vmatpush1.xpose.msra.mxu0 0.0
        %657 = vmatprep.subr.mxu0 0.0
        %658 = vmatpush1.xpose.msra.mxu0 0.0
        %659 = vmatprep.subr.mxu0 0.0
        %660 = vmatpush1.xpose.msra.mxu0 0.0
        %661 = vmatprep.subr.mxu0 0.0
        %662 = vmatpush1.xpose.msra.mxu0 0.0
        %663 = vmatprep.subr.mxu0 0.0
        %664 = vmatpush1.xpose.msra.mxu0 0.0
        %665 = vmatprep.subr.mxu0 0.0
        %666 = vmatpush1.xpose.msra.mxu0 0.0
        %667 = vmatprep.subr.mxu0 0.0
        %668 = vmatpush1.xpose.msra.mxu0 0.0
        %669 = vmatprep.subr.mxu0 0.0
        %670 = vmatpush1.xpose.msra.mxu0 0.0
        %671 = vmatprep.mubr.f32.mxu0 0.0
        %672 = vmatmul.mubr.f32.gmra.mrb[0].mxu0 %v512
        %v673 = vpop.f32.mrb[0].mxu0
        %v674 = vadd.f32 %v508, %v673
        %v675 = vpop.f32.mrb[0].mxu0
        %676 = vmatprep.mubr.f32.mxu0 0.0
        %677 = vmatmul.mubr.f32.gmra.mrb[0].mxu0 %v515
        %v678 = vpop.f32.mrb[0].mxu0
        %v679 = vadd.f32 %v508, %v678
        %v680 = vpop.f32.mrb[0].mxu0
        %681 = vmatprep.mubr.f32.mxu0 0.0
        %682 = vmatmul.mubr.f32.gmra.mrb[0].mxu0 %v518
        %v683 = vpop.f32.mrb[0].mxu0
        %v684 = vadd.f32 %v508, %v683
        %v685 = vpop.f32.mrb[0].mxu0
        %686 = vmatprep.mubr.f32.mxu0 0.0
        %687 = vmatmul.mubr.f32.gmra.mrb[0].mxu0 %v521
        %v688 = vpop.f32.mrb[0].mxu0
        %v689 = vadd.f32 %v508, %v688
        %v690 = vpop.f32.mrb[0].mxu0
        %691 = vmatprep.mubr.f32.mxu0 0.0
        %692 = vmatmul.mubr.f32.gmra.mrb[0].mxu0 %v524
        %v693 = vpop.f32.mrb[0].mxu0
        %v694 = vadd.f32 %v508, %v693
        %v695 = vpop.f32.mrb[0].mxu0
        %696 = vmatprep.mubr.f32.mxu0 0.0
        %697 = vmatmul.mubr.f32.gmra.mrb[0].mxu0 %v527
        %v698 = vpop.f32.mrb[0].mxu0
        %v699 = vadd.f32 %v508, %v698
        %v700 = vpop.f32.mrb[0].mxu0
        %701 = vmatprep.mubr.f32.mxu0 0.0
        %702 = vmatmul.mubr.f32.gmra.mrb[0].mxu0 %v530
        %v703 = vpop.f32.mrb[0].mxu0
        %v704 = vadd.f32 %v508, %v703
        %v705 = vpop.f32.mrb[0].mxu0
        %706 = vmatprep.mubr.f32.mxu0 0.0
        %707 = vmatmul.mubr.f32.gmra.mrb[0].mxu0 %v533
        %v708 = vpop.f32.mrb[0].mxu0
        %v709 = vadd.f32 %v508, %v708
        %v710 = vpop.f32.mrb[0].mxu0
        %711 = vmatprep.mubr.f32.mxu0 0.0
        %712 = vmatmul.mubr.f32.gmra.mrb[0].mxu0 %v536
        %v713 = vpop.f32.mrb[0].mxu0
        %v714 = vadd.f32 %v508, %v713
        %v715 = vpop.f32.mrb[0].mxu0
        %716 = vmatprep.mubr.f32.mxu0 0.0
        %717 = vmatmul.mubr.f32.gmra.mrb[0].mxu0 %v539
        %v718 = vpop.f32.mrb[0].mxu0
        %v719 = vadd.f32 %v508, %v718
        %v720 = vpop.f32.mrb[0].mxu0
        %721 = vmatprep.mubr.f32.mxu0 0.0
        %722 = vmatmul.mubr.f32.gmra.mrb[0].mxu0 %v542
        %v723 = vpop.f32.mrb[0].mxu0
        %v724 = vadd.f32 %v508, %v723
        %v725 = vpop.f32.mrb[0].mxu0
        %726 = vmatprep.mubr.f32.mxu0 0.0
        %727 = vmatmul.mubr.f32.gmra.mrb[0].mxu0 %v545
        %v728 = vpop.f32.mrb[0].mxu0
        %v729 = vadd.f32 %v508, %v728
        %v730 = vpop.f32.mrb[0].mxu0
        %731 = vmatprep.mubr.f32.mxu0 0.0
        %732 = vmatmul.mubr.f32.gmra.mrb[0].mxu0 %v548
        %v733 = vpop.f32.mrb[0].mxu0
        %v734 = vadd.f32 %v508, %v733
        %v735 = vpop.f32.mrb[0].mxu0
        %736 = vmatprep.mubr.f32.mxu0 0.0
        %737 = vmatmul.mubr.f32.gmra.mrb[0].mxu0 %v551
        %v738 = vpop.f32.mrb[0].mxu0
        %v739 = vadd.f32 %v508, %v738
        %v740 = vpop.f32.mrb[0].mxu0
        %741 = vmatprep.mubr.f32.mxu0 0.0
        %742 = vmatmul.mubr.f32.gmra.mrb[0].mxu0 %v554
        %v743 = vpop.f32.mrb[0].mxu0
        %v744 = vadd.f32 %v508, %v743
        %v745 = vpop.f32.mrb[0].mxu0
        %746 = vmatprep.mubr.f32.mxu0 0.0
        %747 = vmatmul.mubr.f32.gmra.mrb[0].mxu0 %v557
        %v748 = vpop.f32.mrb[0].mxu0
        %v749 = vadd.f32 %v508, %v748
        %v750 = vpop.f32.mrb[0].mxu0
        %751 = vdwg.mxu0
        %752 = vst [vmem:[%s257] sm:$0xff] %v674
        %753 = vst [vmem:[%s257 + $0x8] sm:$0xff] %v679
        %754 = vst [vmem:[%s257 + $0x10] sm:$0xff] %v684
        %755 = vst [vmem:[%s257 + $0x18] sm:$0xff] %v689
        %756 = vst [vmem:[%s257 + $0x20] sm:$0xff] %v694
        %757 = vst [vmem:[%s257 + $0x28] sm:$0xff] %v699
        %758 = vst [vmem:[%s257 + $0x30] sm:$0xff] %v704
        %759 = vst [vmem:[%s257 + $0x38] sm:$0xff] %v709
        %760 = vst [vmem:[%s257 + $0x40] sm:$0xff] %v714
        %761 = vst [vmem:[%s257 + $0x48] sm:$0xff] %v719
        %762 = vst [vmem:[%s257 + $0x50] sm:$0xff] %v724
        %763 = vst [vmem:[%s257 + $0x58] sm:$0xff] %v729
        %764 = vst [vmem:[%s257 + $0x60] sm:$0xff] %v734
        %765 = vst [vmem:[%s257 + $0x68] sm:$0xff] %v739
        %766 = vst [vmem:[%s257 + $0x70] sm:$0xff] %v744
        %767 = vst [vmem:[%s257 + $0x78] sm:$0xff] %v749
        %s768 = sand.u32 %s142, 1
        %s769 = scalar_lea.sflag [#allocation5], %s768
        %s770 = sand.u32 %s142, 1
        %s771 = smul.addr %s770, 128
        %s772 = scalar_lea.vmem [#allocation6], %s771
        // Predicated region
        $region45: #{tpu_custom_call.1} parent=35 // pred_check
          %p773 = pneg %p152
        $region46: #{tpu_custom_call.1} parent=35 // pred_check_branch
          %775 = sbr.rel (%p773) target = $region48
        $region47: #{tpu_custom_call.1} parent=35 // pred_region
          %s776 = smul.u32 16, %s25
          %s778 = ssub.s32 2048, 2048
          %779 = vsyncadd %s769, %s778
          %s780 = smul.addr %s776, 3
          %s781 = sadd.s32 %s26, %s780
          %s782 = smul.addr %s781, 128
          %s783 = scalar_lea.hbm %s4, %s782
          %s784 = sshll.u32 %s772, 4
          %s785 = int_to_ptr.vmem [resolvable:$true] %s784
          %790 = dma.vmem_to_hbm [thread:$0]  %s785, 2048, %s783, %s769, 128, 384, 8
        $region48: #{tpu_custom_call.1} parent=35 // pred_fallthru
          _
      $region36: #{tpu_custom_call.1} parent=5 // pred_fallthru
        _
      %p791 = scmp.le.s32.totalorder 2, %s16
      // Predicated region
      $region49: #{tpu_custom_call.1} parent=5 // pred_check
        %p792 = pneg %p791
      $region50: #{tpu_custom_call.1} parent=5 // pred_check_branch
        %794 = sbr.rel (%p792) target = $region52
      $region51: #{tpu_custom_call.1} parent=5 // pred_region
        %s795 = ssub.s32 %s16, 2
        // Predicated region
        $region53: #{tpu_custom_call.1} parent=51 // pred_check
          %p796 = pneg %p158
        $region54: #{tpu_custom_call.1} parent=51 // pred_check_branch
          %798 = sbr.rel (%p796) target = $region56
        $region55: #{tpu_custom_call.1} parent=51 // pred_region
          %s799 = sand.u32 %s143, 1
          %s800 = scalar_lea.sflag [#allocation5], %s799
          %s801 = sand.u32 %s143, 1
          %s802 = smul.addr %s801, 128
          %s803 = scalar_lea.vmem [#allocation6], %s802
          %804 = dma.done %s800, 2048
        $region56: #{tpu_custom_call.1} parent=51 // pred_fallthru
          _
      $region52: #{tpu_custom_call.1} parent=5 // pred_fallthru
        _
    $region6: #{tpu_custom_call.1} parent=1 // loop_footer
      %s20 = sadd.s32 1, %s16
    $region7: #{tpu_custom_call.1} parent=1 // loop_footer_branch
      %15 = sbr.rel target = $region3
    $region8: #{tpu_custom_call.1} parent=1 // loop_exit
      _
    %805 = vsyncpa [#allocation4], 1
    %s806 = scalar_lea.sflag [#allocation4], 1
    %807 = vsyncpa %s806, 1
    %808 = vsyncpa [#allocation5], 1
    %s809 = scalar_lea.sflag [#allocation5], 1
    %810 = vsyncpa %s809, 1

</llo_original>
